<compile_context>
chip_gen: v6e
topology: v6e:2x2x1
jax: 0.10.0
libtpu: 0.0.40
codegen_flags: <defaults>
</compile_context>

<pallas_src>
import functools

import jax
import jax.numpy as jnp
import numpy as np
from jax.experimental import pallas as pl
from jax.experimental.pallas import tpu as pltpu

_NEG_SLOPE = 0.01  # torch.nn.functional.leaky_relu default


# ---------------------------------------------------------------------------
# Stage 1: xw = x @ W  (bf16 operands, f32 MXU accumulation, bf16 output)
# ---------------------------------------------------------------------------
def _xw_kernel(x_ref, w_ref, o_ref):
    o_ref[...] = jnp.dot(
        x_ref[...], w_ref[...], preferred_element_type=jnp.float32
    ).astype(o_ref.dtype)


# ---------------------------------------------------------------------------
# Stage 2: out = leaky_relu(adj @ xw), accumulating directly into the resident
# f32 output tile (grid = (n/tm, n/tk), reduction axis last).
# ---------------------------------------------------------------------------
def _adj_matmul_resident_kernel(adj_ref, xw_ref, o_ref, *, tk):
    """xw is fully VMEM-resident; slice the k-th (tk, d_pad) panel in-kernel."""
    k = pl.program_id(1)
    nk = pl.num_programs(1)

    @pl.when(k == 0)
    def _init():
        o_ref[...] = jnp.zeros_like(o_ref)

    kk = pl.multiple_of(k * tk, 128)
    o_ref[...] += jnp.dot(
        adj_ref[...], xw_ref[pl.ds(kk, tk), :], preferred_element_type=jnp.float32
    )

    @pl.when(k == nk - 1)
    def _finalize():
        h = o_ref[...]
        o_ref[...] = jnp.where(h > 0, h, _NEG_SLOPE * h)


def _adj_matmul_streamed_kernel(adj_ref, xw_ref, o_ref):
    """xw streamed per-k (tk, d_pad) tile (fallback for large n)."""
    k = pl.program_id(1)
    nk = pl.num_programs(1)

    @pl.when(k == 0)
    def _init():
        o_ref[...] = jnp.zeros_like(o_ref)

    o_ref[...] += jnp.dot(
        adj_ref[...], xw_ref[...], preferred_element_type=jnp.float32
    )

    @pl.when(k == nk - 1)
    def _finalize():
        h = o_ref[...]
        o_ref[...] = jnp.where(h > 0, h, _NEG_SLOPE * h)


# ---------------------------------------------------------------------------
# Adjacency preprocessing (hoisted out of the per-call hot path: the adjacency
# of a GCN is static across layers / training steps, so cast it to bf16 once).
# ---------------------------------------------------------------------------
def prepare_adj(adj):
    return jnp.asarray(adj, dtype=jnp.bfloat16)


# ---------------------------------------------------------------------------
# Wrapper
# ---------------------------------------------------------------------------
@functools.partial(jax.jit, static_argnames=("tm", "tk"))
def graph_conv_sparse(x, weight, adj_bf16, *, tm=512, tk=512):
    """Fused GraphConvSparse forward: leaky_relu(adj @ (x @ weight))."""
    n, input_dim = x.shape
    w_in, output_dim = weight.shape
    assert w_in == input_dim
    assert adj_bf16.shape == (n, n)

    tm = min(tm, n)
    tk = min(tk, n)
    assert n % tm == 0 and n % tk == 0, "n must be divisible by the tile sizes"
    # bf16 packs two rows per sublane -> tm must be a multiple of 16.
    assert tm % 16 == 0 and tk % 128 == 0, "tiles must respect bf16 (16,128) tiling"

    # Pad the output feature dim to a multiple of 128 lanes (lane-dense,
    # unmasked stores; full MXU N-dim).  Padded columns are zeros, sliced off
    # at the end.
    d_pad = max(128, ((output_dim + 127) // 128) * 128)
    w_pad = jnp.pad(
        weight.astype(jnp.float32), ((0, 0), (0, d_pad - output_dim))
    ).astype(jnp.bfloat16)
    x_bf16 = x.astype(jnp.bfloat16)
    adj_bf16 = adj_bf16.astype(jnp.bfloat16)  # no-op if pre-cast via prepare_adj

    # ---- Stage 1: xw = x @ W (hoisted, computed once), bf16 in/out ----------
    xw = pl.pallas_call(
        _xw_kernel,
        out_shape=jax.ShapeDtypeStruct((n, d_pad), jnp.bfloat16),
        grid_spec=pltpu.PrefetchScalarGridSpec(
            num_scalar_prefetch=0,
            grid=(n // tm,),
            in_specs=[
                pl.BlockSpec((tm, input_dim), lambda i: (i, 0)),
                pl.BlockSpec((input_dim, d_pad), lambda i: (0, 0)),
            ],
            out_specs=pl.BlockSpec((tm, d_pad), lambda i: (i, 0)),
        ),
        compiler_params=pltpu.CompilerParams(
            dimension_semantics=("parallel",)
        ),
        cost_estimate=pl.CostEstimate(
            flops=2 * n * input_dim * d_pad,
            transcendentals=0,
            bytes_accessed=n * input_dim * 2 + input_dim * d_pad * 2 + n * d_pad * 2,
        ),
    )(x_bf16, w_pad)

    n_i, n_k = n // tm, n // tk

    # xw fully VMEM-resident when small: it is then read from HBM exactly once
    # instead of n/tm times.  (Budget keeps the combined stage-2 working set
    # well inside v7x's 64 MiB VMEM even at 2048-wide adj tiles.)
    xw_resident = (n * d_pad * 2) <= (8 << 20)

    if xw_resident:
        kernel = functools.partial(_adj_matmul_resident_kernel, tk=tk)
        xw_spec = pl.BlockSpec((n, d_pad), lambda i, k: (0, 0))
        xw_hbm_read_bytes = n * d_pad * 2
        xw_vmem_bytes = 2 * n * d_pad * 2
    else:
        kernel = _adj_matmul_streamed_kernel
        xw_spec = pl.BlockSpec((tk, d_pad), lambda i, k: (k, 0))
        xw_hbm_read_bytes = n_i * n * d_pad * 2
        xw_vmem_bytes = 2 * tk * d_pad * 2

    # Stage-2 working set (double-buffered adj + xw + resident f32 out tile).
    stage2_vmem = (2 * tm * tk * 2) + xw_vmem_bytes + (2 * tm * d_pad * 4)
    vmem_limit = int(min(max(int(stage2_vmem * 1.5), 32 << 20), 64 << 20))

    # ---- Stage 2: out = leaky_relu(adj @ xw), accumulate into o_ref ---------
    # NOTE: on v5e, if a profile still shows DMA exposed after tiling up, add
    #   pipeline_mode=pl.Buffered(3)  to the adj BlockSpec.
    out_pad = pl.pallas_call(
        kernel,
        out_shape=jax.ShapeDtypeStruct((n, d_pad), jnp.float32),
        grid_spec=pltpu.PrefetchScalarGridSpec(
            num_scalar_prefetch=0,
            grid=(n_i, n_k),
            in_specs=[
                pl.BlockSpec((tm, tk), lambda i, k: (i, k)),  # adj (bf16)
                xw_spec,                                      # xw  (bf16)
            ],
            out_specs=pl.BlockSpec((tm, d_pad), lambda i, k: (i, 0)),
        ),
        compiler_params=pltpu.CompilerParams(
            dimension_semantics=("parallel", "arbitrary"),
            vmem_limit_bytes=vmem_limit,
        ),
        cost_estimate=pl.CostEstimate(
            flops=2 * n * n * d_pad,
            transcendentals=0,
            bytes_accessed=n * n * 2 + xw_hbm_read_bytes + n * d_pad * 4,
        ),
    )(adj_bf16, xw)

    return out_pad[:, :output_dim]


# ---------------------------------------------------------------------------
# Init / reference / demo
# ---------------------------------------------------------------------------
def glorot_init(key, input_dim, output_dim):
    # Mirrors the PyTorch glorot_init: uniform in [-r, r), r = sqrt(6/(in+out))
    init_range = np.sqrt(6.0 / (input_dim + output_dim))
    u = jax.random.uniform(key, (input_dim, output_dim), dtype=jnp.float32)
    return u * 2.0 * init_range - init_range


def _reference(x, weight, adj):
    h = adj @ (x @ weight)
    return jnp.where(h > 0, h, _NEG_SLOPE * h)


if __name__ == "__main__":
    N = 256          # number of graph nodes
    INPUT_DIM = 64   # input feature dim
    OUTPUT_DIM = 32  # output feature dim

    key = jax.random.PRNGKey(0)
    k_x, k_w, k_adj = jax.random.split(key, 3)

    x = jax.random.normal(k_x, (N, INPUT_DIM), dtype=jnp.float32)
    weight = glorot_init(k_w, INPUT_DIM, OUTPUT_DIM)
    # Dense synthetic ~5%-dense normalized-ish adjacency (torch.mm semantics
    # are identical for dense or sparse adj).  Values {0, 0.125} are exact bf16.
    adj = (jax.random.uniform(k_adj, (N, N), dtype=jnp.float32) < 0.05).astype(
        jnp.float32
    ) / 8.0

    # Adjacency preprocessing done ONCE, outside the jitted per-call path.
    adj_bf16 = prepare_adj(adj)

    out = graph_conv_sparse(x, weight, adj_bf16)
    out = jax.block_until_ready(out)

    ref = _reference(x, weight, adj)
    # bf16 streaming of adj / xw introduces ~2^-8 relative error vs the pure
    # f32 reference; accumulation itself is f32.
    np.testing.assert_allclose(
        np.asarray(out), np.asarray(ref), rtol=2e-2, atol=2e-2
    )

    print("KERNEL_OK")
</pallas_src>

<mosaic_0001>
module attributes {stable_mosaic.version = 11 : i64} {
  func.func @_xw_kernel(%arg0: i32, %arg1: memref<256x64xbf16, #tpu.memory_space<vmem>>, %arg2: memref<64x128xbf16, #tpu.memory_space<vmem>>, %arg3: memref<256x128xbf16, #tpu.memory_space<vmem>>) attributes {dimension_semantics = [#tpu.dimension_semantics<parallel>], iteration_bounds = array<i64: 1>, scalar_prefetch = 0 : i64, scratch_operands = 0 : i64, tpu.core_type = #tpu.core_type<tc>, window_params = [{transform_indices = @transform_0, window_bounds = array<i64: 256, 64>}, {pipeline_mode = #tpu.pipeline_mode<synchronous>, transform_indices = @transform_1, window_bounds = array<i64: 64, 128>}, {transform_indices = @transform_2, window_bounds = array<i64: 256, 128>}]} {
    %c0 = arith.constant 0 : index
    %c0_0 = arith.constant 0 : index
    %0 = vector.load %arg1[%c0, %c0_0] : memref<256x64xbf16, #tpu.memory_space<vmem>>, vector<256x64xbf16>
    %c0_1 = arith.constant 0 : index
    %c0_2 = arith.constant 0 : index
    %1 = vector.load %arg2[%c0_1, %c0_2] : memref<64x128xbf16, #tpu.memory_space<vmem>>, vector<64x128xbf16>
    %cst = arith.constant dense<0.000000e+00> : vector<256x128xf32>
    %2 = tpu.matmul %0, %1, %cst {dimension_numbers = #tpu.dot_dimension_numbers<[1], [0], [0], [1], [0, 0, 1, 1], [], []>} : vector<256x64xbf16>, vector<64x128xbf16>, vector<256x128xf32> -> vector<256x128xf32>
    %3 = arith.truncf %2 : vector<256x128xf32> to vector<256x128xbf16>
    %c0_3 = arith.constant 0 : index
    %c0_4 = arith.constant 0 : index
    %4 = vector.load %arg3[%c0_3, %c0_4] : memref<256x128xbf16, #tpu.memory_space<vmem>>, vector<256x128xbf16>
    tpu.vector_store %arg3[%c0_3, %c0_4], %3 {strides = array<i32>} : memref<256x128xbf16, #tpu.memory_space<vmem>>, vector<256x128xbf16>,
    return
  }
  func.func @transform_0(%arg0: i32) -> (i32, i32) {
    %c0_i32 = arith.constant 0 : i32
    %c0_i32_0 = arith.constant 0 : i32
    return %arg0, %c0_i32 : i32, i32
  }
  func.func @transform_1(%arg0: i32) -> (i32, i32) {
    %c0_i32 = arith.constant 0 : i32
    %c0_i32_0 = arith.constant 0 : i32
    %c0_i32_1 = arith.constant 0 : i32
    return %c0_i32, %c0_i32_0 : i32, i32
  }
  func.func @transform_2(%arg0: i32) -> (i32, i32) {
    %c0_i32 = arith.constant 0 : i32
    %c0_i32_0 = arith.constant 0 : i32
    return %arg0, %c0_i32 : i32, i32
  }
}

module attributes {stable_mosaic.version = 11 : i64} {
  func.func @_adj_matmul_resident_kernel(%arg0: i32, %arg1: i32, %arg2: memref<256x256xbf16, #tpu.memory_space<vmem>>, %arg3: memref<256x128xbf16, #tpu.memory_space<vmem>>, %arg4: memref<256x128xf32, #tpu.memory_space<vmem>>) attributes {dimension_semantics = [#tpu.dimension_semantics<parallel>, #tpu.dimension_semantics<arbitrary>], iteration_bounds = array<i64: 1, 1>, scalar_prefetch = 0 : i64, scratch_operands = 0 : i64, tpu.core_type = #tpu.core_type<tc>, window_params = [{transform_indices = @transform_0, window_bounds = array<i64: 256, 256>}, {pipeline_mode = #tpu.pipeline_mode<synchronous>, transform_indices = @transform_1, window_bounds = array<i64: 256, 128>}, {transform_indices = @transform_2, window_bounds = array<i64: 256, 128>}]} {
    %c0_i32 = arith.constant 0 : i32
    %0 = arith.cmpi eq, %arg1, %c0_i32 : i32
    %1 = arith.extui %0 : i1 to i32
    %c0_i32_0 = arith.constant 0 : i32
    %2 = arith.cmpi ne, %1, %c0_i32_0 : i32
    scf.if %2 {
      %cst_9 = arith.constant 0.000000e+00 : f32
      %15 = vector.broadcast %cst_9 : f32 to vector<256x128xf32>
      %c0_10 = arith.constant 0 : index
      %c0_11 = arith.constant 0 : index
      %16 = vector.load %arg4[%c0_10, %c0_11] : memref<256x128xf32, #tpu.memory_space<vmem>>, vector<256x128xf32>
      tpu.vector_store %arg4[%c0_10, %c0_11], %15 {strides = array<i32>} : memref<256x128xf32, #tpu.memory_space<vmem>>, vector<256x128xf32>,
    } else {
    }
    %c256_i32 = arith.constant 256 : i32
    %3 = arith.muli %arg1, %c256_i32 : i32
    %4 = tpu.assume_multiple %3, 128 : i32
    %c0 = arith.constant 0 : index
    %c0_1 = arith.constant 0 : index
    %5 = vector.load %arg4[%c0, %c0_1] : memref<256x128xf32, #tpu.memory_space<vmem>>, vector<256x128xf32>
    %c0_2 = arith.constant 0 : index
    %c0_3 = arith.constant 0 : index
    %6 = vector.load %arg2[%c0_2, %c0_3] : memref<256x256xbf16, #tpu.memory_space<vmem>>, vector<256x256xbf16>
    %7 = arith.index_cast %4 : i32 to index
    %c0_4 = arith.constant 0 : index
    %8 = vector.load %arg3[%7, %c0_4] : memref<256x128xbf16, #tpu.memory_space<vmem>>, vector<256x128xbf16>
    %cst = arith.constant dense<0.000000e+00> : vector<256x128xf32>
    %9 = tpu.matmul %6, %8, %cst {dimension_numbers = #tpu.dot_dimension_numbers<[1], [0], [0], [1], [0, 0, 1, 1], [], []>} : vector<256x256xbf16>, vector<256x128xbf16>, vector<256x128xf32> -> vector<256x128xf32>
    %10 = arith.addf %5, %9 : vector<256x128xf32>
    %c0_5 = arith.constant 0 : index
    %c0_6 = arith.constant 0 : index
    %11 = vector.load %arg4[%c0_5, %c0_6] : memref<256x128xf32, #tpu.memory_space<vmem>>, vector<256x128xf32>
    tpu.vector_store %arg4[%c0_5, %c0_6], %10 {strides = array<i32>} : memref<256x128xf32, #tpu.memory_space<vmem>>, vector<256x128xf32>,
    %c0_i32_7 = arith.constant 0 : i32
    %12 = arith.cmpi eq, %arg1, %c0_i32_7 : i32
    %13 = arith.extui %12 : i1 to i32
    %c0_i32_8 = arith.constant 0 : i32
    %14 = arith.cmpi ne, %13, %c0_i32_8 : i32
    scf.if %14 {
      %c0_9 = arith.constant 0 : index
      %c0_10 = arith.constant 0 : index
      %15 = vector.load %arg4[%c0_9, %c0_10] : memref<256x128xf32, #tpu.memory_space<vmem>>, vector<256x128xf32>
      %cst_11 = arith.constant 0.000000e+00 : f32
      %16 = vector.broadcast %cst_11 : f32 to vector<256x128xf32>
      %17 = arith.cmpf ogt, %15, %16 : vector<256x128xf32>
      %cst_12 = arith.constant 0.00999999977 : f32
      %18 = vector.broadcast %cst_12 : f32 to vector<256x128xf32>
      %19 = arith.mulf %18, %15 : vector<256x128xf32>
      %20 = arith.select %17, %15, %19 : vector<256x128xi1>, vector<256x128xf32>
      %c0_13 = arith.constant 0 : index
      %c0_14 = arith.constant 0 : index
      %21 = vector.load %arg4[%c0_13, %c0_14] : memref<256x128xf32, #tpu.memory_space<vmem>>, vector<256x128xf32>
      tpu.vector_store %arg4[%c0_13, %c0_14], %20 {strides = array<i32>} : memref<256x128xf32, #tpu.memory_space<vmem>>, vector<256x128xf32>,
    } else {
    }
    return
  }
  func.func @transform_0(%arg0: i32, %arg1: i32) -> (i32, i32) {
    %c0_i32 = arith.constant 0 : i32
    return %arg0, %arg1 : i32, i32
  }
  func.func @transform_1(%arg0: i32, %arg1: i32) -> (i32, i32) {
    %c0_i32 = arith.constant 0 : i32
    %c0_i32_0 = arith.constant 0 : i32
    %c0_i32_1 = arith.constant 0 : i32
    return %c0_i32, %c0_i32_0 : i32, i32
  }
  func.func @transform_2(%arg0: i32, %arg1: i32) -> (i32, i32) {
    %c0_i32 = arith.constant 0 : i32
    %c0_i32_0 = arith.constant 0 : i32
    return %arg0, %c0_i32 : i32, i32
  }
}

</mosaic_0001>

<llo_original>
// kernel: graph_conv_sparse.2
$region0: #{graph_conv_sparse.2}
  #allocation0 [shape = 'u32[]', space=smem, size = 0x4, offset = 0x4, fixed_abs, tag = 'smem constant byte address 0x4 - core index']
  #allocation1 [shape = 'u32[144,128]{1,0:T(1,128)}', space=vmem, size = 0x12000, scoped, tag = 'internal scratch']
  %s0 = inlined_call_operand.vmem [shape: bf16[256,64], index: 0, kind: input, shape index: {}]
  %s1 = inlined_call_operand.vmem [shape: bf16[64,128], index: 1, kind: input, shape index: {}]
  %s2 = inlined_call_operand.vmem [shape: bf16[256,128], index: 2, kind: output, shape index: {}]
  %s3 = sld [smem:[#allocation0]]
  $region18: #{graph_conv_sparse.2} parent=0
    _
  %s5 = ssub.s32 1, %s3
  %s6 = scalar_select 0, %s5, %s3
  // Predicated region
  $region2: #{graph_conv_sparse.2} parent=0 // pred_check
    _
  $region3: #{graph_conv_sparse.2} parent=0 // pred_check_branch
    %8 = sbr.rel (0) target = $region5
  $region4: #{graph_conv_sparse.2} parent=0 // pred_region
    _
  $region5: #{graph_conv_sparse.2} parent=0 // pred_fallthru
    _
  // Predicated region
  $region6: #{graph_conv_sparse.2} parent=0 // pred_check
    _
  $region7: #{graph_conv_sparse.2} parent=0 // pred_check_branch
    %10 = sbr.rel (0) target = $region9
  $region8: #{graph_conv_sparse.2} parent=0 // pred_region
    _
  $region9: #{graph_conv_sparse.2} parent=0 // pred_fallthru
    _
  %v12 = vld [vmem:[%s0] sm:$0xf]
  %v13 = vld [vmem:[%s0 + $0x4] sm:$0xf]
  %v14 = vld [vmem:[%s0 + $0x8] sm:$0xf]
  %v15 = vld [vmem:[%s0 + $0xc] sm:$0xf]
  %v16 = vld [vmem:[%s0 + $0x10] sm:$0xf]
  %v17 = vld [vmem:[%s0 + $0x14] sm:$0xf]
  %v18 = vld [vmem:[%s0 + $0x18] sm:$0xf]
  %v19 = vld [vmem:[%s0 + $0x1c] sm:$0xf]
  %v20 = vld [vmem:[%s0 + $0x20] sm:$0xf]
  %v21 = vld [vmem:[%s0 + $0x24] sm:$0xf]
  %v22 = vld [vmem:[%s0 + $0x28] sm:$0xf]
  %v23 = vld [vmem:[%s0 + $0x2c] sm:$0xf]
  %v24 = vld [vmem:[%s0 + $0x30] sm:$0xf]
  %v25 = vld [vmem:[%s0 + $0x34] sm:$0xf]
  %v26 = vld [vmem:[%s0 + $0x38] sm:$0xf]
  %v27 = vld [vmem:[%s0 + $0x3c] sm:$0xf]
  %v28 = vld [vmem:[%s0 + $0x40] sm:$0xf]
  %v29 = vld [vmem:[%s0 + $0x44] sm:$0xf]
  %v30 = vld [vmem:[%s0 + $0x48] sm:$0xf]
  %v31 = vld [vmem:[%s0 + $0x4c] sm:$0xf]
  %v32 = vld [vmem:[%s0 + $0x50] sm:$0xf]
  %v33 = vld [vmem:[%s0 + $0x54] sm:$0xf]
  %v34 = vld [vmem:[%s0 + $0x58] sm:$0xf]
  %v35 = vld [vmem:[%s0 + $0x5c] sm:$0xf]
  %v36 = vld [vmem:[%s0 + $0x60] sm:$0xf]
  %v37 = vld [vmem:[%s0 + $0x64] sm:$0xf]
  %v38 = vld [vmem:[%s0 + $0x68] sm:$0xf]
  %v39 = vld [vmem:[%s0 + $0x6c] sm:$0xf]
  %v40 = vld [vmem:[%s0 + $0x70] sm:$0xf]
  %v41 = vld [vmem:[%s0 + $0x74] sm:$0xf]
  %v42 = vld [vmem:[%s0 + $0x78] sm:$0xf]
  %v43 = vld [vmem:[%s0 + $0x7c] sm:$0xf]
  %v44 = vld [vmem:[%s1] sm:$0xf]
  %v45 = vld [vmem:[%s1 + $0x4] sm:$0xf]
  %v46 = vld [vmem:[%s1 + $0x8] sm:$0xf]
  %v47 = vld [vmem:[%s1 + $0xc] sm:$0xf]
  %v48 = vld [vmem:[%s1 + $0x10] sm:$0xf]
  %v49 = vld [vmem:[%s1 + $0x14] sm:$0xf]
  %v50 = vld [vmem:[%s1 + $0x18] sm:$0xf]
  %v51 = vld [vmem:[%s1 + $0x1c] sm:$0xf]
  %v84 = vunpack.c.l.b16 %v12
  %v85 = vunpack.c.l.b16 %v13
  %v86 = vunpack.c.l.b16 %v14
  %v87 = vunpack.c.l.b16 %v15
  %v88 = vunpack.c.l.b16 %v16
  %v89 = vunpack.c.l.b16 %v17
  %v90 = vunpack.c.l.b16 %v18
  %v91 = vunpack.c.l.b16 %v19
  %v92 = vunpack.c.l.b16 %v20
  %v93 = vunpack.c.l.b16 %v21
  %v94 = vunpack.c.l.b16 %v22
  %v95 = vunpack.c.l.b16 %v23
  %v96 = vunpack.c.l.b16 %v24
  %v97 = vunpack.c.l.b16 %v25
  %v98 = vunpack.c.l.b16 %v26
  %v99 = vunpack.c.l.b16 %v27
  %v100 = vunpack.c.l.b16 %v28
  %v101 = vunpack.c.l.b16 %v29
  %v102 = vunpack.c.l.b16 %v30
  %v103 = vunpack.c.l.b16 %v31
  %v104 = vunpack.c.l.b16 %v32
  %v105 = vunpack.c.l.b16 %v33
  %v106 = vunpack.c.l.b16 %v34
  %v107 = vunpack.c.l.b16 %v35
  %v108 = vunpack.c.l.b16 %v36
  %v109 = vunpack.c.l.b16 %v37
  %v110 = vunpack.c.l.b16 %v38
  %v111 = vunpack.c.l.b16 %v39
  %v112 = vunpack.c.l.b16 %v40
  %v113 = vunpack.c.l.b16 %v41
  %v114 = vunpack.c.l.b16 %v42
  %v115 = vunpack.c.l.b16 %v43
  %v116 = vpack.c.b16 %v85, %v84
  %v117 = vpack.c.b16 %v87, %v86
  %v118 = vpack.c.b16 %v89, %v88
  %v119 = vpack.c.b16 %v91, %v90
  %v120 = vpack.c.b16 %v93, %v92
  %v121 = vpack.c.b16 %v95, %v94
  %v122 = vpack.c.b16 %v97, %v96
  %v123 = vpack.c.b16 %v99, %v98
  %v124 = vpack.c.b16 %v101, %v100
  %v125 = vpack.c.b16 %v103, %v102
  %v126 = vpack.c.b16 %v105, %v104
  %v127 = vpack.c.b16 %v107, %v106
  %v128 = vpack.c.b16 %v109, %v108
  %v129 = vpack.c.b16 %v111, %v110
  %v130 = vpack.c.b16 %v113, %v112
  %v131 = vpack.c.b16 %v115, %v114
  %v140 = vunpack.c.l.b16 %v44
  %v141 = vunpack.c.l.b16 %v45
  %v142 = vunpack.c.l.b16 %v46
  %v143 = vunpack.c.l.b16 %v47
  %v144 = vunpack.c.l.b16 %v48
  %v145 = vunpack.c.l.b16 %v49
  %v146 = vunpack.c.l.b16 %v50
  %v147 = vunpack.c.l.b16 %v51
  %v148 = vpack.c.b16 %v141, %v140
  %v149 = vpack.c.b16 %v143, %v142
  %v150 = vpack.c.b16 %v145, %v144
  %v151 = vpack.c.b16 %v147, %v146
  %vm156 = vcmask 523264
  %v158 = vsel %vm156, %v116, 0
  %v161 = vsel %vm156, %v117, 0
  %v164 = vsel %vm156, %v118, 0
  %v167 = vsel %vm156, %v119, 0
  %v170 = vsel %vm156, %v120, 0
  %v173 = vsel %vm156, %v121, 0
  %v176 = vsel %vm156, %v122, 0
  %v179 = vsel %vm156, %v123, 0
  %v182 = vsel %vm156, %v124, 0
  %v185 = vsel %vm156, %v125, 0
  %v188 = vsel %vm156, %v126, 0
  %v191 = vsel %vm156, %v127, 0
  %v194 = vsel %vm156, %v128, 0
  %v197 = vsel %vm156, %v129, 0
  %v200 = vsel %vm156, %v130, 0
  %v203 = vsel %vm156, %v131, 0
  %205 = vmatprep.subr.bf16.mxu0 0
  %206 = vmatpush1.bf16.msra.mxu0 0
  %207 = vmatprep.subr.bf16.mxu0 0
  %208 = vmatpush1.bf16.msra.mxu0 0
  %209 = vmatprep.subr.bf16.mxu0 0
  %210 = vmatpush1.bf16.msra.mxu0 0
  %211 = vmatprep.subr.bf16.mxu0 0
  %212 = vmatpush1.bf16.msra.mxu0 0
  %213 = vmatprep.subr.bf16.mxu0 0
  %214 = vmatpush1.bf16.msra.mxu0 %v151
  %215 = vmatprep.subr.bf16.mxu0 0
  %216 = vmatpush1.bf16.msra.mxu0 %v150
  %217 = vmatprep.subr.bf16.mxu0 0
  %218 = vmatpush1.bf16.msra.mxu0 %v149
  %219 = vmatprep.subr.bf16.mxu0 0
  %220 = vmatpush1.bf16.msra.mxu0 %v148
  %221 = vmatprep.subr.bf16.mxu0 0
  %222 = vmatpush2.bf16.msra.mxu0 0
  %223 = vmatprep.subr.bf16.mxu0 0
  %224 = vmatpush2.bf16.msra.mxu0 0
  %225 = vmatprep.subr.bf16.mxu0 0
  %226 = vmatpush2.bf16.msra.mxu0 0
  %227 = vmatprep.subr.bf16.mxu0 0
  %228 = vmatpush2.bf16.msra.mxu0 0
  %229 = vmatprep.subr.bf16.mxu0 0
  %230 = vmatpush2.bf16.msra.mxu0 0
  %231 = vmatprep.subr.bf16.mxu0 0
  %232 = vmatpush2.bf16.msra.mxu0 0
  %233 = vmatprep.subr.bf16.mxu0 0
  %234 = vmatpush2.bf16.msra.mxu0 0
  %235 = vmatprep.subr.bf16.mxu0 0
  %236 = vmatpush2.bf16.msra.mxu0 0
  %237 = vmatprep.mubr.bf16.mxu0 0
  %238 = vmatmul.mubr.bf16.gmra.mxu0 %v158
  %v239 = vpop.f32.mrf.mxu0
  %v240 = vadd.f32 0.0, %v239
  %v241 = vpop.f32.mrf.mxu0
  %v242 = vpop.f32.mrf.mxu0
  %v243 = vadd.f32 0.0, %v242
  %v244 = vpop.f32.mrf.mxu0
  %245 = vmatprep.mubr.bf16.mxu0 0
  %246 = vmatmul.mubr.bf16.gmra.mxu0 %v161
  %v247 = vpop.f32.mrf.mxu0
  %v248 = vadd.f32 0.0, %v247
  %v249 = vpop.f32.mrf.mxu0
  %v250 = vpop.f32.mrf.mxu0
  %v251 = vadd.f32 0.0, %v250
  %v252 = vpop.f32.mrf.mxu0
  %253 = vmatprep.mubr.bf16.mxu0 0
  %254 = vmatmul.mubr.bf16.gmra.mxu0 %v164
  %v255 = vpop.f32.mrf.mxu0
  %v256 = vadd.f32 0.0, %v255
  %v257 = vpop.f32.mrf.mxu0
  %v258 = vpop.f32.mrf.mxu0
  %v259 = vadd.f32 0.0, %v258
  %v260 = vpop.f32.mrf.mxu0
  %261 = vmatprep.mubr.bf16.mxu0 0
  %262 = vmatmul.mubr.bf16.gmra.mxu0 %v167
  %v263 = vpop.f32.mrf.mxu0
  %v264 = vadd.f32 0.0, %v263
  %v265 = vpop.f32.mrf.mxu0
  %v266 = vpop.f32.mrf.mxu0
  %v267 = vadd.f32 0.0, %v266
  %v268 = vpop.f32.mrf.mxu0
  %269 = vmatprep.mubr.bf16.mxu0 0
  %270 = vmatmul.mubr.bf16.gmra.mxu0 %v170
  %v271 = vpop.f32.mrf.mxu0
  %v272 = vadd.f32 0.0, %v271
  %v273 = vpop.f32.mrf.mxu0
  %v274 = vpop.f32.mrf.mxu0
  %v275 = vadd.f32 0.0, %v274
  %v276 = vpop.f32.mrf.mxu0
  %277 = vmatprep.mubr.bf16.mxu0 0
  %278 = vmatmul.mubr.bf16.gmra.mxu0 %v173
  %v279 = vpop.f32.mrf.mxu0
  %v280 = vadd.f32 0.0, %v279
  %v281 = vpop.f32.mrf.mxu0
  %v282 = vpop.f32.mrf.mxu0
  %v283 = vadd.f32 0.0, %v282
  %v284 = vpop.f32.mrf.mxu0
  %285 = vmatprep.mubr.bf16.mxu0 0
  %286 = vmatmul.mubr.bf16.gmra.mxu0 %v176
  %v287 = vpop.f32.mrf.mxu0
  %v288 = vadd.f32 0.0, %v287
  %v289 = vpop.f32.mrf.mxu0
  %v290 = vpop.f32.mrf.mxu0
  %v291 = vadd.f32 0.0, %v290
  %v292 = vpop.f32.mrf.mxu0
  %293 = vmatprep.mubr.bf16.mxu0 0
  %294 = vmatmul.mubr.bf16.gmra.mxu0 %v179
  %v295 = vpop.f32.mrf.mxu0
  %v296 = vadd.f32 0.0, %v295
  %v297 = vpop.f32.mrf.mxu0
  %v298 = vpop.f32.mrf.mxu0
  %v299 = vadd.f32 0.0, %v298
  %v300 = vpop.f32.mrf.mxu0
  %301 = vmatprep.mubr.bf16.mxu0 0
  %302 = vmatmul.mubr.bf16.gmra.mxu0 %v182
  %v303 = vpop.f32.mrf.mxu0
  %v304 = vadd.f32 0.0, %v303
  %v305 = vpop.f32.mrf.mxu0
  %v306 = vpop.f32.mrf.mxu0
  %v307 = vadd.f32 0.0, %v306
  %v308 = vpop.f32.mrf.mxu0
  %309 = vmatprep.mubr.bf16.mxu0 0
  %310 = vmatmul.mubr.bf16.gmra.mxu0 %v185
  %v311 = vpop.f32.mrf.mxu0
  %v312 = vadd.f32 0.0, %v311
  %v313 = vpop.f32.mrf.mxu0
  %v314 = vpop.f32.mrf.mxu0
  %v315 = vadd.f32 0.0, %v314
  %v316 = vpop.f32.mrf.mxu0
  %317 = vmatprep.mubr.bf16.mxu0 0
  %318 = vmatmul.mubr.bf16.gmra.mxu0 %v188
  %v319 = vpop.f32.mrf.mxu0
  %v320 = vadd.f32 0.0, %v319
  %v321 = vpop.f32.mrf.mxu0
  %v322 = vpop.f32.mrf.mxu0
  %v323 = vadd.f32 0.0, %v322
  %v324 = vpop.f32.mrf.mxu0
  %325 = vmatprep.mubr.bf16.mxu0 0
  %326 = vmatmul.mubr.bf16.gmra.mxu0 %v191
  %v327 = vpop.f32.mrf.mxu0
  %v328 = vadd.f32 0.0, %v327
  %v329 = vpop.f32.mrf.mxu0
  %v330 = vpop.f32.mrf.mxu0
  %v331 = vadd.f32 0.0, %v330
  %v332 = vpop.f32.mrf.mxu0
  %333 = vmatprep.mubr.bf16.mxu0 0
  %334 = vmatmul.mubr.bf16.gmra.mxu0 %v194
  %v335 = vpop.f32.mrf.mxu0
  %v336 = vadd.f32 0.0, %v335
  %v337 = vpop.f32.mrf.mxu0
  %v338 = vpop.f32.mrf.mxu0
  %v339 = vadd.f32 0.0, %v338
  %v340 = vpop.f32.mrf.mxu0
  %341 = vmatprep.mubr.bf16.mxu0 0
  %342 = vmatmul.mubr.bf16.gmra.mxu0 %v197
  %v343 = vpop.f32.mrf.mxu0
  %v344 = vadd.f32 0.0, %v343
  %v345 = vpop.f32.mrf.mxu0
  %v346 = vpop.f32.mrf.mxu0
  %v347 = vadd.f32 0.0, %v346
  %v348 = vpop.f32.mrf.mxu0
  %349 = vmatprep.mubr.bf16.mxu0 0
  %350 = vmatmul.mubr.bf16.gmra.mxu0 %v200
  %v351 = vpop.f32.mrf.mxu0
  %v352 = vadd.f32 0.0, %v351
  %v353 = vpop.f32.mrf.mxu0
  %v354 = vpop.f32.mrf.mxu0
  %v355 = vadd.f32 0.0, %v354
  %v356 = vpop.f32.mrf.mxu0
  %357 = vmatprep.mubr.bf16.mxu0 0
  %358 = vmatmul.mubr.bf16.gmra.mxu0 %v203
  %v359 = vpop.f32.mrf.mxu0
  %v360 = vadd.f32 0.0, %v359
  %v361 = vpop.f32.mrf.mxu0
  %v362 = vpop.f32.mrf.mxu0
  %v363 = vadd.f32 0.0, %v362
  %v364 = vpop.f32.mrf.mxu0
  %365 = vdwg.mxu0
  %v366 = vpack.c.bf16 %v243, %v240
  %v367 = vpack.c.bf16 %v251, %v248
  %v368 = vpack.c.bf16 %v259, %v256
  %v369 = vpack.c.bf16 %v267, %v264
  %v370 = vpack.c.bf16 %v275, %v272
  %v371 = vpack.c.bf16 %v283, %v280
  %v372 = vpack.c.bf16 %v291, %v288
  %v373 = vpack.c.bf16 %v299, %v296
  %v374 = vpack.c.bf16 %v307, %v304
  %v375 = vpack.c.bf16 %v315, %v312
  %v376 = vpack.c.bf16 %v323, %v320
  %v377 = vpack.c.bf16 %v331, %v328
  %v378 = vpack.c.bf16 %v339, %v336
  %v379 = vpack.c.bf16 %v347, %v344
  %v380 = vpack.c.bf16 %v355, %v352
  %v381 = vpack.c.bf16 %v363, %v360
  %v398 = vunpack.c.l.b16 %v366
  %v399 = vunpack.c.h.b16 %v366
  %v400 = vunpack.c.l.b16 %v367
  %v401 = vunpack.c.h.b16 %v367
  %v402 = vunpack.c.l.b16 %v368
  %v403 = vunpack.c.h.b16 %v368
  %v404 = vunpack.c.l.b16 %v369
  %v405 = vunpack.c.h.b16 %v369
  %v406 = vunpack.c.l.b16 %v370
  %v407 = vunpack.c.h.b16 %v370
  %v408 = vunpack.c.l.b16 %v371
  %v409 = vunpack.c.h.b16 %v371
  %v410 = vunpack.c.l.b16 %v372
  %v411 = vunpack.c.h.b16 %v372
  %v412 = vunpack.c.l.b16 %v373
  %v413 = vunpack.c.h.b16 %v373
  %v414 = vunpack.c.l.b16 %v374
  %v415 = vunpack.c.h.b16 %v374
  %v416 = vunpack.c.l.b16 %v375
  %v417 = vunpack.c.h.b16 %v375
  %v418 = vunpack.c.l.b16 %v376
  %v419 = vunpack.c.h.b16 %v376
  %v420 = vunpack.c.l.b16 %v377
  %v421 = vunpack.c.h.b16 %v377
  %v422 = vunpack.c.l.b16 %v378
  %v423 = vunpack.c.h.b16 %v378
  %v424 = vunpack.c.l.b16 %v379
  %v425 = vunpack.c.h.b16 %v379
  %v426 = vunpack.c.l.b16 %v380
  %v427 = vunpack.c.h.b16 %v380
  %v428 = vunpack.c.l.b16 %v381
  %v429 = vunpack.c.h.b16 %v381
  %v430 = vpack.c.b16 %v398, %v398
  %v431 = vpack.c.b16 %v399, %v399
  %v432 = vpack.c.b16 %v400, %v400
  %v433 = vpack.c.b16 %v401, %v401
  %v434 = vpack.c.b16 %v402, %v402
  %v435 = vpack.c.b16 %v403, %v403
  %v436 = vpack.c.b16 %v404, %v404
  %v437 = vpack.c.b16 %v405, %v405
  %v438 = vpack.c.b16 %v406, %v406
  %v439 = vpack.c.b16 %v407, %v407
  %v440 = vpack.c.b16 %v408, %v408
  %v441 = vpack.c.b16 %v409, %v409
  %v442 = vpack.c.b16 %v410, %v410
  %v443 = vpack.c.b16 %v411, %v411
  %v444 = vpack.c.b16 %v412, %v412
  %v445 = vpack.c.b16 %v413, %v413
  %v446 = vpack.c.b16 %v414, %v414
  %v447 = vpack.c.b16 %v415, %v415
  %v448 = vpack.c.b16 %v416, %v416
  %v449 = vpack.c.b16 %v417, %v417
  %v450 = vpack.c.b16 %v418, %v418
  %v451 = vpack.c.b16 %v419, %v419
  %v452 = vpack.c.b16 %v420, %v420
  %v453 = vpack.c.b16 %v421, %v421
  %v454 = vpack.c.b16 %v422, %v422
  %v455 = vpack.c.b16 %v423, %v423
  %v456 = vpack.c.b16 %v424, %v424
  %v457 = vpack.c.b16 %v425, %v425
  %v458 = vpack.c.b16 %v426, %v426
  %v459 = vpack.c.b16 %v427, %v427
  %v460 = vpack.c.b16 %v428, %v428
  %v461 = vpack.c.b16 %v429, %v429
  %494 = vst [vmem:[%s2] sm:$0xf] %v430
  %495 = vst [vmem:[%s2 + $0x4] sm:$0xf] %v431
  %496 = vst [vmem:[%s2 + $0x8] sm:$0xf] %v432
  %497 = vst [vmem:[%s2 + $0xc] sm:$0xf] %v433
  %498 = vst [vmem:[%s2 + $0x10] sm:$0xf] %v434
  %499 = vst [vmem:[%s2 + $0x14] sm:$0xf] %v435
  %500 = vst [vmem:[%s2 + $0x18] sm:$0xf] %v436
  %501 = vst [vmem:[%s2 + $0x1c] sm:$0xf] %v437
  %502 = vst [vmem:[%s2 + $0x20] sm:$0xf] %v438
  %503 = vst [vmem:[%s2 + $0x24] sm:$0xf] %v439
  %504 = vst [vmem:[%s2 + $0x28] sm:$0xf] %v440
  %505 = vst [vmem:[%s2 + $0x2c] sm:$0xf] %v441
  %506 = vst [vmem:[%s2 + $0x30] sm:$0xf] %v442
  %507 = vst [vmem:[%s2 + $0x34] sm:$0xf] %v443
  %508 = vst [vmem:[%s2 + $0x38] sm:$0xf] %v444
  %509 = vst [vmem:[%s2 + $0x3c] sm:$0xf] %v445
  %510 = vst [vmem:[%s2 + $0x40] sm:$0xf] %v446
  %511 = vst [vmem:[%s2 + $0x44] sm:$0xf] %v447
  %512 = vst [vmem:[%s2 + $0x48] sm:$0xf] %v448
  %513 = vst [vmem:[%s2 + $0x4c] sm:$0xf] %v449
  %514 = vst [vmem:[%s2 + $0x50] sm:$0xf] %v450
  %515 = vst [vmem:[%s2 + $0x54] sm:$0xf] %v451
  %516 = vst [vmem:[%s2 + $0x58] sm:$0xf] %v452
  %517 = vst [vmem:[%s2 + $0x5c] sm:$0xf] %v453
  %518 = vst [vmem:[%s2 + $0x60] sm:$0xf] %v454
  %519 = vst [vmem:[%s2 + $0x64] sm:$0xf] %v455
  %520 = vst [vmem:[%s2 + $0x68] sm:$0xf] %v456
  %521 = vst [vmem:[%s2 + $0x6c] sm:$0xf] %v457
  %522 = vst [vmem:[%s2 + $0x70] sm:$0xf] %v458
  %523 = vst [vmem:[%s2 + $0x74] sm:$0xf] %v459
  %524 = vst [vmem:[%s2 + $0x78] sm:$0xf] %v460
  %525 = vst [vmem:[%s2 + $0x7c] sm:$0xf] %v461
  // Predicated region
  $region10: #{graph_conv_sparse.2} parent=0 // pred_check
    _
  $region11: #{graph_conv_sparse.2} parent=0 // pred_check_branch
    %527 = sbr.rel (0) target = $region13
  $region12: #{graph_conv_sparse.2} parent=0 // pred_region
    _
  $region13: #{graph_conv_sparse.2} parent=0 // pred_fallthru
    _
  // Predicated region
  $region14: #{graph_conv_sparse.2} parent=0 // pred_check
    _
  $region15: #{graph_conv_sparse.2} parent=0 // pred_check_branch
    %529 = sbr.rel (0) target = $region17
  $region16: #{graph_conv_sparse.2} parent=0 // pred_region
    _
  $region17: #{graph_conv_sparse.2} parent=0 // pred_fallthru
    _

// kernel: graph_conv_sparse.3
$region0: #{graph_conv_sparse.3}
  #allocation0 [shape = 'u32[]', space=smem, size = 0x4, offset = 0x4, fixed_abs, tag = 'smem constant byte address 0x4 - core index']
  #allocation1 [shape = 'u32[144,128]{1,0:T(1,128)}', space=vmem, size = 0x12000, scoped, tag = 'internal scratch']
  %s0 = inlined_call_operand.vmem [shape: bf16[256,256], index: 0, kind: input, shape index: {}]
  %s1 = inlined_call_operand.vmem [shape: bf16[256,128], index: 1, kind: input, shape index: {}]
  %s2 = inlined_call_operand.vmem [shape: f32[256,128], index: 2, kind: output, shape index: {}]
  %s3 = sld [smem:[#allocation0]]
  $region26: #{graph_conv_sparse.3} parent=0
    _
  %s5 = ssub.s32 1, %s3
  %s6 = scalar_select 0, %s5, %s3
  // Predicated region
  $region2: #{graph_conv_sparse.3} parent=0 // pred_check
    _
  $region3: #{graph_conv_sparse.3} parent=0 // pred_check_branch
    %8 = sbr.rel (0) target = $region5
  $region4: #{graph_conv_sparse.3} parent=0 // pred_region
    _
  $region5: #{graph_conv_sparse.3} parent=0 // pred_fallthru
    _
  // Predicated region
  $region6: #{graph_conv_sparse.3} parent=0 // pred_check
    _
  $region7: #{graph_conv_sparse.3} parent=0 // pred_check_branch
    %10 = sbr.rel (0) target = $region9
  $region8: #{graph_conv_sparse.3} parent=0 // pred_region
    _
  $region9: #{graph_conv_sparse.3} parent=0 // pred_fallthru
    _
  %p12 = scmp.eq.s32.totalorder 0, 0
  // Predicated region
  $region10: #{graph_conv_sparse.3} parent=0 // pred_check
    %p13 = pneg %p12
  $region11: #{graph_conv_sparse.3} parent=0 // pred_check_branch
    %15 = sbr.rel (%p13) target = $region13
  $region12: #{graph_conv_sparse.3} parent=0 // pred_region
    %16 = vst [vmem:[%s2] sm:$0xff] 0.0
    %17 = vst [vmem:[%s2 + $0x8] sm:$0xff] 0.0
    %18 = vst [vmem:[%s2 + $0x10] sm:$0xff] 0.0
    %19 = vst [vmem:[%s2 + $0x18] sm:$0xff] 0.0
    %20 = vst [vmem:[%s2 + $0x20] sm:$0xff] 0.0
    %21 = vst [vmem:[%s2 + $0x28] sm:$0xff] 0.0
    %22 = vst [vmem:[%s2 + $0x30] sm:$0xff] 0.0
    %23 = vst [vmem:[%s2 + $0x38] sm:$0xff] 0.0
    %24 = vst [vmem:[%s2 + $0x40] sm:$0xff] 0.0
    %25 = vst [vmem:[%s2 + $0x48] sm:$0xff] 0.0
    %26 = vst [vmem:[%s2 + $0x50] sm:$0xff] 0.0
    %27 = vst [vmem:[%s2 + $0x58] sm:$0xff] 0.0
    %28 = vst [vmem:[%s2 + $0x60] sm:$0xff] 0.0
    %29 = vst [vmem:[%s2 + $0x68] sm:$0xff] 0.0
    %30 = vst [vmem:[%s2 + $0x70] sm:$0xff] 0.0
    %31 = vst [vmem:[%s2 + $0x78] sm:$0xff] 0.0
    %32 = vst [vmem:[%s2 + $0x80] sm:$0xff] 0.0
    %33 = vst [vmem:[%s2 + $0x88] sm:$0xff] 0.0
    %34 = vst [vmem:[%s2 + $0x90] sm:$0xff] 0.0
    %35 = vst [vmem:[%s2 + $0x98] sm:$0xff] 0.0
    %36 = vst [vmem:[%s2 + $0xa0] sm:$0xff] 0.0
    %37 = vst [vmem:[%s2 + $0xa8] sm:$0xff] 0.0
    %38 = vst [vmem:[%s2 + $0xb0] sm:$0xff] 0.0
    %39 = vst [vmem:[%s2 + $0xb8] sm:$0xff] 0.0
    %40 = vst [vmem:[%s2 + $0xc0] sm:$0xff] 0.0
    %41 = vst [vmem:[%s2 + $0xc8] sm:$0xff] 0.0
    %42 = vst [vmem:[%s2 + $0xd0] sm:$0xff] 0.0
    %43 = vst [vmem:[%s2 + $0xd8] sm:$0xff] 0.0
    %44 = vst [vmem:[%s2 + $0xe0] sm:$0xff] 0.0
    %45 = vst [vmem:[%s2 + $0xe8] sm:$0xff] 0.0
    %46 = vst [vmem:[%s2 + $0xf0] sm:$0xff] 0.0
    %47 = vst [vmem:[%s2 + $0xf8] sm:$0xff] 0.0
  $region13: #{graph_conv_sparse.3} parent=0 // pred_fallthru
    _
  %s48 = smul.u32 0, 256
  %v49 = vld [vmem:[%s2] sm:$0xff]
  %v50 = vld [vmem:[%s2 + $0x8] sm:$0xff]
  %v51 = vld [vmem:[%s2 + $0x10] sm:$0xff]
  %v52 = vld [vmem:[%s2 + $0x18] sm:$0xff]
  %v53 = vld [vmem:[%s2 + $0x20] sm:$0xff]
  %v54 = vld [vmem:[%s2 + $0x28] sm:$0xff]
  %v55 = vld [vmem:[%s2 + $0x30] sm:$0xff]
  %v56 = vld [vmem:[%s2 + $0x38] sm:$0xff]
  %v57 = vld [vmem:[%s2 + $0x40] sm:$0xff]
  %v58 = vld [vmem:[%s2 + $0x48] sm:$0xff]
  %v59 = vld [vmem:[%s2 + $0x50] sm:$0xff]
  %v60 = vld [vmem:[%s2 + $0x58] sm:$0xff]
  %v61 = vld [vmem:[%s2 + $0x60] sm:$0xff]
  %v62 = vld [vmem:[%s2 + $0x68] sm:$0xff]
  %v63 = vld [vmem:[%s2 + $0x70] sm:$0xff]
  %v64 = vld [vmem:[%s2 + $0x78] sm:$0xff]
  %v65 = vld [vmem:[%s2 + $0x80] sm:$0xff]
  %v66 = vld [vmem:[%s2 + $0x88] sm:$0xff]
  %v67 = vld [vmem:[%s2 + $0x90] sm:$0xff]
  %v68 = vld [vmem:[%s2 + $0x98] sm:$0xff]
  %v69 = vld [vmem:[%s2 + $0xa0] sm:$0xff]
  %v70 = vld [vmem:[%s2 + $0xa8] sm:$0xff]
  %v71 = vld [vmem:[%s2 + $0xb0] sm:$0xff]
  %v72 = vld [vmem:[%s2 + $0xb8] sm:$0xff]
  %v73 = vld [vmem:[%s2 + $0xc0] sm:$0xff]
  %v74 = vld [vmem:[%s2 + $0xc8] sm:$0xff]
  %v75 = vld [vmem:[%s2 + $0xd0] sm:$0xff]
  %v76 = vld [vmem:[%s2 + $0xd8] sm:$0xff]
  %v77 = vld [vmem:[%s2 + $0xe0] sm:$0xff]
  %v78 = vld [vmem:[%s2 + $0xe8] sm:$0xff]
  %v79 = vld [vmem:[%s2 + $0xf0] sm:$0xff]
  %v80 = vld [vmem:[%s2 + $0xf8] sm:$0xff]
  %v81 = vld [vmem:[%s0] sm:$0xff]
  %v82 = vld [vmem:[%s0 + $0x8] sm:$0xff]
  %v83 = vld [vmem:[%s0 + $0x10] sm:$0xff]
  %v84 = vld [vmem:[%s0 + $0x18] sm:$0xff]
  %v85 = vld [vmem:[%s0 + $0x20] sm:$0xff]
  %v86 = vld [vmem:[%s0 + $0x28] sm:$0xff]
  %v87 = vld [vmem:[%s0 + $0x30] sm:$0xff]
  %v88 = vld [vmem:[%s0 + $0x38] sm:$0xff]
  %v89 = vld [vmem:[%s0 + $0x40] sm:$0xff]
  %v90 = vld [vmem:[%s0 + $0x48] sm:$0xff]
  %v91 = vld [vmem:[%s0 + $0x50] sm:$0xff]
  %v92 = vld [vmem:[%s0 + $0x58] sm:$0xff]
  %v93 = vld [vmem:[%s0 + $0x60] sm:$0xff]
  %v94 = vld [vmem:[%s0 + $0x68] sm:$0xff]
  %v95 = vld [vmem:[%s0 + $0x70] sm:$0xff]
  %v96 = vld [vmem:[%s0 + $0x78] sm:$0xff]
  %v97 = vld [vmem:[%s0 + $0x80] sm:$0xff]
  %v98 = vld [vmem:[%s0 + $0x88] sm:$0xff]
  %v99 = vld [vmem:[%s0 + $0x90] sm:$0xff]
  %v100 = vld [vmem:[%s0 + $0x98] sm:$0xff]
  %v101 = vld [vmem:[%s0 + $0xa0] sm:$0xff]
  %v102 = vld [vmem:[%s0 + $0xa8] sm:$0xff]
  %v103 = vld [vmem:[%s0 + $0xb0] sm:$0xff]
  %v104 = vld [vmem:[%s0 + $0xb8] sm:$0xff]
  %v105 = vld [vmem:[%s0 + $0xc0] sm:$0xff]
  %v106 = vld [vmem:[%s0 + $0xc8] sm:$0xff]
  %v107 = vld [vmem:[%s0 + $0xd0] sm:$0xff]
  %v108 = vld [vmem:[%s0 + $0xd8] sm:$0xff]
  %v109 = vld [vmem:[%s0 + $0xe0] sm:$0xff]
  %v110 = vld [vmem:[%s0 + $0xe8] sm:$0xff]
  %v111 = vld [vmem:[%s0 + $0xf0] sm:$0xff]
  %v112 = vld [vmem:[%s0 + $0xf8] sm:$0xff]
  %s113 = sshra.s32 %s48, 3
  %s114 = sand.u32 %s48, 7
  %s115 = smul.addr %s113, 4
  %s116 = scalar_lea.vmem %s1, %s115
  %v117 = vld [vmem:[%s116] sm:$0xf]
  %v118 = vld [vmem:[%s116 + $0x4] sm:$0xf]
  %v119 = vld [vmem:[%s116 + $0x8] sm:$0xf]
  %v120 = vld [vmem:[%s116 + $0xc] sm:$0xf]
  %v121 = vld [vmem:[%s116 + $0x10] sm:$0xf]
  %v122 = vld [vmem:[%s116 + $0x14] sm:$0xf]
  %v123 = vld [vmem:[%s116 + $0x18] sm:$0xf]
  %v124 = vld [vmem:[%s116 + $0x1c] sm:$0xf]
  %v125 = vld [vmem:[%s116 + $0x20] sm:$0xf]
  %v126 = vld [vmem:[%s116 + $0x24] sm:$0xf]
  %v127 = vld [vmem:[%s116 + $0x28] sm:$0xf]
  %v128 = vld [vmem:[%s116 + $0x2c] sm:$0xf]
  %v129 = vld [vmem:[%s116 + $0x30] sm:$0xf]
  %v130 = vld [vmem:[%s116 + $0x34] sm:$0xf]
  %v131 = vld [vmem:[%s116 + $0x38] sm:$0xf]
  %v132 = vld [vmem:[%s116 + $0x3c] sm:$0xf]
  %v133 = vld [vmem:[%s116 + $0x40] sm:$0xf]
  %v134 = vld [vmem:[%s116 + $0x44] sm:$0xf]
  %v135 = vld [vmem:[%s116 + $0x48] sm:$0xf]
  %v136 = vld [vmem:[%s116 + $0x4c] sm:$0xf]
  %v137 = vld [vmem:[%s116 + $0x50] sm:$0xf]
  %v138 = vld [vmem:[%s116 + $0x54] sm:$0xf]
  %v139 = vld [vmem:[%s116 + $0x58] sm:$0xf]
  %v140 = vld [vmem:[%s116 + $0x5c] sm:$0xf]
  %v141 = vld [vmem:[%s116 + $0x60] sm:$0xf]
  %v142 = vld [vmem:[%s116 + $0x64] sm:$0xf]
  %v143 = vld [vmem:[%s116 + $0x68] sm:$0xf]
  %v144 = vld [vmem:[%s116 + $0x6c] sm:$0xf]
  %v145 = vld [vmem:[%s116 + $0x70] sm:$0xf]
  %v146 = vld [vmem:[%s116 + $0x74] sm:$0xf]
  %v147 = vld [vmem:[%s116 + $0x78] sm:$0xf]
  %v148 = vld [vmem:[%s116 + $0x7c] sm:$0xf]
  %v181 = vunpack.c.l.b16 %v81
  %v182 = vunpack.c.h.b16 %v81
  %v183 = vunpack.c.l.b16 %v82
  %v184 = vunpack.c.h.b16 %v82
  %v185 = vunpack.c.l.b16 %v83
  %v186 = vunpack.c.h.b16 %v83
  %v187 = vunpack.c.l.b16 %v84
  %v188 = vunpack.c.h.b16 %v84
  %v189 = vunpack.c.l.b16 %v85
  %v190 = vunpack.c.h.b16 %v85
  %v191 = vunpack.c.l.b16 %v86
  %v192 = vunpack.c.h.b16 %v86
  %v193 = vunpack.c.l.b16 %v87
  %v194 = vunpack.c.h.b16 %v87
  %v195 = vunpack.c.l.b16 %v88
  %v196 = vunpack.c.h.b16 %v88
  %v197 = vunpack.c.l.b16 %v89
  %v198 = vunpack.c.h.b16 %v89
  %v199 = vunpack.c.l.b16 %v90
  %v200 = vunpack.c.h.b16 %v90
  %v201 = vunpack.c.l.b16 %v91
  %v202 = vunpack.c.h.b16 %v91
  %v203 = vunpack.c.l.b16 %v92
  %v204 = vunpack.c.h.b16 %v92
  %v205 = vunpack.c.l.b16 %v93
  %v206 = vunpack.c.h.b16 %v93
  %v207 = vunpack.c.l.b16 %v94
  %v208 = vunpack.c.h.b16 %v94
  %v209 = vunpack.c.l.b16 %v95
  %v210 = vunpack.c.h.b16 %v95
  %v211 = vunpack.c.l.b16 %v96
  %v212 = vunpack.c.h.b16 %v96
  %v213 = vunpack.c.l.b16 %v97
  %v214 = vunpack.c.h.b16 %v97
  %v215 = vunpack.c.l.b16 %v98
  %v216 = vunpack.c.h.b16 %v98
  %v217 = vunpack.c.l.b16 %v99
  %v218 = vunpack.c.h.b16 %v99
  %v219 = vunpack.c.l.b16 %v100
  %v220 = vunpack.c.h.b16 %v100
  %v221 = vunpack.c.l.b16 %v101
  %v222 = vunpack.c.h.b16 %v101
  %v223 = vunpack.c.l.b16 %v102
  %v224 = vunpack.c.h.b16 %v102
  %v225 = vunpack.c.l.b16 %v103
  %v226 = vunpack.c.h.b16 %v103
  %v227 = vunpack.c.l.b16 %v104
  %v228 = vunpack.c.h.b16 %v104
  %v229 = vunpack.c.l.b16 %v105
  %v230 = vunpack.c.h.b16 %v105
  %v231 = vunpack.c.l.b16 %v106
  %v232 = vunpack.c.h.b16 %v106
  %v233 = vunpack.c.l.b16 %v107
  %v234 = vunpack.c.h.b16 %v107
  %v235 = vunpack.c.l.b16 %v108
  %v236 = vunpack.c.h.b16 %v108
  %v237 = vunpack.c.l.b16 %v109
  %v238 = vunpack.c.h.b16 %v109
  %v239 = vunpack.c.l.b16 %v110
  %v240 = vunpack.c.h.b16 %v110
  %v241 = vunpack.c.l.b16 %v111
  %v242 = vunpack.c.h.b16 %v111
  %v243 = vunpack.c.l.b16 %v112
  %v244 = vunpack.c.h.b16 %v112
  %v245 = vpack.c.b16 %v183, %v181
  %v246 = vpack.c.b16 %v184, %v182
  %v247 = vpack.c.b16 %v187, %v185
  %v248 = vpack.c.b16 %v188, %v186
  %v249 = vpack.c.b16 %v191, %v189
  %v250 = vpack.c.b16 %v192, %v190
  %v251 = vpack.c.b16 %v195, %v193
  %v252 = vpack.c.b16 %v196, %v194
  %v253 = vpack.c.b16 %v199, %v197
  %v254 = vpack.c.b16 %v200, %v198
  %v255 = vpack.c.b16 %v203, %v201
  %v256 = vpack.c.b16 %v204, %v202
  %v257 = vpack.c.b16 %v207, %v205
  %v258 = vpack.c.b16 %v208, %v206
  %v259 = vpack.c.b16 %v211, %v209
  %v260 = vpack.c.b16 %v212, %v210
  %v261 = vpack.c.b16 %v215, %v213
  %v262 = vpack.c.b16 %v216, %v214
  %v263 = vpack.c.b16 %v219, %v217
  %v264 = vpack.c.b16 %v220, %v218
  %v265 = vpack.c.b16 %v223, %v221
  %v266 = vpack.c.b16 %v224, %v222
  %v267 = vpack.c.b16 %v227, %v225
  %v268 = vpack.c.b16 %v228, %v226
  %v269 = vpack.c.b16 %v231, %v229
  %v270 = vpack.c.b16 %v232, %v230
  %v271 = vpack.c.b16 %v235, %v233
  %v272 = vpack.c.b16 %v236, %v234
  %v273 = vpack.c.b16 %v239, %v237
  %v274 = vpack.c.b16 %v240, %v238
  %v275 = vpack.c.b16 %v243, %v241
  %v276 = vpack.c.b16 %v244, %v242
  %v341 = vunpack.c.l.b16 %v117
  %v342 = vunpack.c.l.b16 %v118
  %v343 = vunpack.c.l.b16 %v119
  %v344 = vunpack.c.l.b16 %v120
  %v345 = vunpack.c.l.b16 %v121
  %v346 = vunpack.c.l.b16 %v122
  %v347 = vunpack.c.l.b16 %v123
  %v348 = vunpack.c.l.b16 %v124
  %v349 = vunpack.c.l.b16 %v125
  %v350 = vunpack.c.l.b16 %v126
  %v351 = vunpack.c.l.b16 %v127
  %v352 = vunpack.c.l.b16 %v128
  %v353 = vunpack.c.l.b16 %v129
  %v354 = vunpack.c.l.b16 %v130
  %v355 = vunpack.c.l.b16 %v131
  %v356 = vunpack.c.l.b16 %v132
  %v357 = vunpack.c.l.b16 %v133
  %v358 = vunpack.c.l.b16 %v134
  %v359 = vunpack.c.l.b16 %v135
  %v360 = vunpack.c.l.b16 %v136
  %v361 = vunpack.c.l.b16 %v137
  %v362 = vunpack.c.l.b16 %v138
  %v363 = vunpack.c.l.b16 %v139
  %v364 = vunpack.c.l.b16 %v140
  %v365 = vunpack.c.l.b16 %v141
  %v366 = vunpack.c.l.b16 %v142
  %v367 = vunpack.c.l.b16 %v143
  %v368 = vunpack.c.l.b16 %v144
  %v369 = vunpack.c.l.b16 %v145
  %v370 = vunpack.c.l.b16 %v146
  %v371 = vunpack.c.l.b16 %v147
  %v372 = vunpack.c.l.b16 %v148
  %v373 = vpack.c.b16 %v342, %v341
  %v374 = vpack.c.b16 %v344, %v343
  %v375 = vpack.c.b16 %v346, %v345
  %v376 = vpack.c.b16 %v348, %v347
  %v377 = vpack.c.b16 %v350, %v349
  %v378 = vpack.c.b16 %v352, %v351
  %v379 = vpack.c.b16 %v354, %v353
  %v380 = vpack.c.b16 %v356, %v355
  %v381 = vpack.c.b16 %v358, %v357
  %v382 = vpack.c.b16 %v360, %v359
  %v383 = vpack.c.b16 %v362, %v361
  %v384 = vpack.c.b16 %v364, %v363
  %v385 = vpack.c.b16 %v366, %v365
  %v386 = vpack.c.b16 %v368, %v367
  %v387 = vpack.c.b16 %v370, %v369
  %v388 = vpack.c.b16 %v372, %v371
  %405 = vmatprep.subr.bf16.mxu0 0
  %406 = vmatpush1.bf16.msra.mxu0 %v380
  %407 = vmatprep.subr.bf16.mxu0 0
  %408 = vmatpush1.bf16.msra.mxu0 %v379
  %409 = vmatprep.subr.bf16.mxu0 0
  %410 = vmatpush1.bf16.msra.mxu0 %v378
  %411 = vmatprep.subr.bf16.mxu0 0
  %412 = vmatpush1.bf16.msra.mxu0 %v377
  %413 = vmatprep.subr.bf16.mxu0 0
  %414 = vmatpush1.bf16.msra.mxu0 %v376
  %415 = vmatprep.subr.bf16.mxu0 0
  %416 = vmatpush1.bf16.msra.mxu0 %v375
  %417 = vmatprep.subr.bf16.mxu0 0
  %418 = vmatpush1.bf16.msra.mxu0 %v374
  %419 = vmatprep.subr.bf16.mxu0 0
  %420 = vmatpush1.bf16.msra.mxu0 %v373
  %421 = vmatprep.subr.bf16.mxu0 0
  %422 = vmatpush2.bf16.msra.mxu0 %v388
  %423 = vmatprep.subr.bf16.mxu0 0
  %424 = vmatpush2.bf16.msra.mxu0 %v387
  %425 = vmatprep.subr.bf16.mxu0 0
  %426 = vmatpush2.bf16.msra.mxu0 %v386
  %427 = vmatprep.subr.bf16.mxu0 0
  %428 = vmatpush2.bf16.msra.mxu0 %v385
  %429 = vmatprep.subr.bf16.mxu0 0
  %430 = vmatpush2.bf16.msra.mxu0 %v384
  %431 = vmatprep.subr.bf16.mxu0 0
  %432 = vmatpush2.bf16.msra.mxu0 %v383
  %433 = vmatprep.subr.bf16.mxu0 0
  %434 = vmatpush2.bf16.msra.mxu0 %v382
  %435 = vmatprep.subr.bf16.mxu0 0
  %436 = vmatpush2.bf16.msra.mxu0 %v381
  %437 = vmatprep.mubr.bf16.mxu0 %v246
  %438 = vmatmul.mubr.bf16.gmra.mxu0 %v245
  %v439 = vpop.f32.mrf.mxu0
  %v440 = vadd.f32 0.0, %v439
  %v441 = vpop.f32.mrf.mxu0
  %v442 = vpop.f32.mrf.mxu0
  %v443 = vadd.f32 0.0, %v442
  %v444 = vpop.f32.mrf.mxu0
  %445 = vmatprep.mubr.bf16.mxu0 %v248
  %446 = vmatmul.mubr.bf16.gmra.mxu0 %v247
  %v447 = vpop.f32.mrf.mxu0
  %v448 = vadd.f32 0.0, %v447
  %v449 = vpop.f32.mrf.mxu0
  %v450 = vpop.f32.mrf.mxu0
  %v451 = vadd.f32 0.0, %v450
  %v452 = vpop.f32.mrf.mxu0
  %453 = vmatprep.mubr.bf16.mxu0 %v250
  %454 = vmatmul.mubr.bf16.gmra.mxu0 %v249
  %v455 = vpop.f32.mrf.mxu0
  %v456 = vadd.f32 0.0, %v455
  %v457 = vpop.f32.mrf.mxu0
  %v458 = vpop.f32.mrf.mxu0
  %v459 = vadd.f32 0.0, %v458
  %v460 = vpop.f32.mrf.mxu0
  %461 = vmatprep.mubr.bf16.mxu0 %v252
  %462 = vmatmul.mubr.bf16.gmra.mxu0 %v251
  %v463 = vpop.f32.mrf.mxu0
  %v464 = vadd.f32 0.0, %v463
  %v465 = vpop.f32.mrf.mxu0
  %v466 = vpop.f32.mrf.mxu0
  %v467 = vadd.f32 0.0, %v466
  %v468 = vpop.f32.mrf.mxu0
  %469 = vmatprep.mubr.bf16.mxu0 %v254
  %470 = vmatmul.mubr.bf16.gmra.mxu0 %v253
  %v471 = vpop.f32.mrf.mxu0
  %v472 = vadd.f32 0.0, %v471
  %v473 = vpop.f32.mrf.mxu0
  %v474 = vpop.f32.mrf.mxu0
  %v475 = vadd.f32 0.0, %v474
  %v476 = vpop.f32.mrf.mxu0
  %477 = vmatprep.mubr.bf16.mxu0 %v256
  %478 = vmatmul.mubr.bf16.gmra.mxu0 %v255
  %v479 = vpop.f32.mrf.mxu0
  %v480 = vadd.f32 0.0, %v479
  %v481 = vpop.f32.mrf.mxu0
  %v482 = vpop.f32.mrf.mxu0
  %v483 = vadd.f32 0.0, %v482
  %v484 = vpop.f32.mrf.mxu0
  %485 = vmatprep.mubr.bf16.mxu0 %v258
  %486 = vmatmul.mubr.bf16.gmra.mxu0 %v257
  %v487 = vpop.f32.mrf.mxu0
  %v488 = vadd.f32 0.0, %v487
  %v489 = vpop.f32.mrf.mxu0
  %v490 = vpop.f32.mrf.mxu0
  %v491 = vadd.f32 0.0, %v490
  %v492 = vpop.f32.mrf.mxu0
  %493 = vmatprep.mubr.bf16.mxu0 %v260
  %494 = vmatmul.mubr.bf16.gmra.mxu0 %v259
  %v495 = vpop.f32.mrf.mxu0
  %v496 = vadd.f32 0.0, %v495
  %v497 = vpop.f32.mrf.mxu0
  %v498 = vpop.f32.mrf.mxu0
  %v499 = vadd.f32 0.0, %v498
  %v500 = vpop.f32.mrf.mxu0
  %501 = vmatprep.mubr.bf16.mxu0 %v262
  %502 = vmatmul.mubr.bf16.gmra.mxu0 %v261
  %v503 = vpop.f32.mrf.mxu0
  %v504 = vadd.f32 0.0, %v503
  %v505 = vpop.f32.mrf.mxu0
  %v506 = vpop.f32.mrf.mxu0
  %v507 = vadd.f32 0.0, %v506
  %v508 = vpop.f32.mrf.mxu0
  %509 = vmatprep.mubr.bf16.mxu0 %v264
  %510 = vmatmul.mubr.bf16.gmra.mxu0 %v263
  %v511 = vpop.f32.mrf.mxu0
  %v512 = vadd.f32 0.0, %v511
  %v513 = vpop.f32.mrf.mxu0
  %v514 = vpop.f32.mrf.mxu0
  %v515 = vadd.f32 0.0, %v514
  %v516 = vpop.f32.mrf.mxu0
  %517 = vmatprep.mubr.bf16.mxu0 %v266
  %518 = vmatmul.mubr.bf16.gmra.mxu0 %v265
  %v519 = vpop.f32.mrf.mxu0
  %v520 = vadd.f32 0.0, %v519
  %v521 = vpop.f32.mrf.mxu0
  %v522 = vpop.f32.mrf.mxu0
  %v523 = vadd.f32 0.0, %v522
  %v524 = vpop.f32.mrf.mxu0
  %525 = vmatprep.mubr.bf16.mxu0 %v268
  %526 = vmatmul.mubr.bf16.gmra.mxu0 %v267
  %v527 = vpop.f32.mrf.mxu0
  %v528 = vadd.f32 0.0, %v527
  %v529 = vpop.f32.mrf.mxu0
  %v530 = vpop.f32.mrf.mxu0
  %v531 = vadd.f32 0.0, %v530
  %v532 = vpop.f32.mrf.mxu0
  %533 = vmatprep.mubr.bf16.mxu0 %v270
  %534 = vmatmul.mubr.bf16.gmra.mxu0 %v269
  %v535 = vpop.f32.mrf.mxu0
  %v536 = vadd.f32 0.0, %v535
  %v537 = vpop.f32.mrf.mxu0
  %v538 = vpop.f32.mrf.mxu0
  %v539 = vadd.f32 0.0, %v538
  %v540 = vpop.f32.mrf.mxu0
  %541 = vmatprep.mubr.bf16.mxu0 %v272
  %542 = vmatmul.mubr.bf16.gmra.mxu0 %v271
  %v543 = vpop.f32.mrf.mxu0
  %v544 = vadd.f32 0.0, %v543
  %v545 = vpop.f32.mrf.mxu0
  %v546 = vpop.f32.mrf.mxu0
  %v547 = vadd.f32 0.0, %v546
  %v548 = vpop.f32.mrf.mxu0
  %549 = vmatprep.mubr.bf16.mxu0 %v274
  %550 = vmatmul.mubr.bf16.gmra.mxu0 %v273
  %v551 = vpop.f32.mrf.mxu0
  %v552 = vadd.f32 0.0, %v551
  %v553 = vpop.f32.mrf.mxu0
  %v554 = vpop.f32.mrf.mxu0
  %v555 = vadd.f32 0.0, %v554
  %v556 = vpop.f32.mrf.mxu0
  %557 = vmatprep.mubr.bf16.mxu0 %v276
  %558 = vmatmul.mubr.bf16.gmra.mxu0 %v275
  %v559 = vpop.f32.mrf.mxu0
  %v560 = vadd.f32 0.0, %v559
  %v561 = vpop.f32.mrf.mxu0
  %v562 = vpop.f32.mrf.mxu0
  %v563 = vadd.f32 0.0, %v562
  %v564 = vpop.f32.mrf.mxu0
  %565 = vdwg.mxu0
  %v566 = vadd.f32 %v49, %v440
  %v567 = vadd.f32 %v50, %v443
  %v568 = vadd.f32 %v51, %v448
  %v569 = vadd.f32 %v52, %v451
  %v570 = vadd.f32 %v53, %v456
  %v571 = vadd.f32 %v54, %v459
  %v572 = vadd.f32 %v55, %v464
  %v573 = vadd.f32 %v56, %v467
  %v574 = vadd.f32 %v57, %v472
  %v575 = vadd.f32 %v58, %v475
  %v576 = vadd.f32 %v59, %v480
  %v577 = vadd.f32 %v60, %v483
  %v578 = vadd.f32 %v61, %v488
  %v579 = vadd.f32 %v62, %v491
  %v580 = vadd.f32 %v63, %v496
  %v581 = vadd.f32 %v64, %v499
  %v582 = vadd.f32 %v65, %v504
  %v583 = vadd.f32 %v66, %v507
  %v584 = vadd.f32 %v67, %v512
  %v585 = vadd.f32 %v68, %v515
  %v586 = vadd.f32 %v69, %v520
  %v587 = vadd.f32 %v70, %v523
  %v588 = vadd.f32 %v71, %v528
  %v589 = vadd.f32 %v72, %v531
  %v590 = vadd.f32 %v73, %v536
  %v591 = vadd.f32 %v74, %v539
  %v592 = vadd.f32 %v75, %v544
  %v593 = vadd.f32 %v76, %v547
  %v594 = vadd.f32 %v77, %v552
  %v595 = vadd.f32 %v78, %v555
  %v596 = vadd.f32 %v79, %v560
  %v597 = vadd.f32 %v80, %v563
  %598 = vst [vmem:[%s2] sm:$0xff] %v566
  %599 = vst [vmem:[%s2 + $0x8] sm:$0xff] %v567
  %600 = vst [vmem:[%s2 + $0x10] sm:$0xff] %v568
  %601 = vst [vmem:[%s2 + $0x18] sm:$0xff] %v569
  %602 = vst [vmem:[%s2 + $0x20] sm:$0xff] %v570
  %603 = vst [vmem:[%s2 + $0x28] sm:$0xff] %v571
  %604 = vst [vmem:[%s2 + $0x30] sm:$0xff] %v572
  %605 = vst [vmem:[%s2 + $0x38] sm:$0xff] %v573
  %606 = vst [vmem:[%s2 + $0x40] sm:$0xff] %v574
  %607 = vst [vmem:[%s2 + $0x48] sm:$0xff] %v575
  %608 = vst [vmem:[%s2 + $0x50] sm:$0xff] %v576
  %609 = vst [vmem:[%s2 + $0x58] sm:$0xff] %v577
  %610 = vst [vmem:[%s2 + $0x60] sm:$0xff] %v578
  %611 = vst [vmem:[%s2 + $0x68] sm:$0xff] %v579
  %612 = vst [vmem:[%s2 + $0x70] sm:$0xff] %v580
  %613 = vst [vmem:[%s2 + $0x78] sm:$0xff] %v581
  %614 = vst [vmem:[%s2 + $0x80] sm:$0xff] %v582
  %615 = vst [vmem:[%s2 + $0x88] sm:$0xff] %v583
  %616 = vst [vmem:[%s2 + $0x90] sm:$0xff] %v584
  %617 = vst [vmem:[%s2 + $0x98] sm:$0xff] %v585
  %618 = vst [vmem:[%s2 + $0xa0] sm:$0xff] %v586
  %619 = vst [vmem:[%s2 + $0xa8] sm:$0xff] %v587
  %620 = vst [vmem:[%s2 + $0xb0] sm:$0xff] %v588
  %621 = vst [vmem:[%s2 + $0xb8] sm:$0xff] %v589
  %622 = vst [vmem:[%s2 + $0xc0] sm:$0xff] %v590
  %623 = vst [vmem:[%s2 + $0xc8] sm:$0xff] %v591
  %624 = vst [vmem:[%s2 + $0xd0] sm:$0xff] %v592
  %625 = vst [vmem:[%s2 + $0xd8] sm:$0xff] %v593
  %626 = vst [vmem:[%s2 + $0xe0] sm:$0xff] %v594
  %627 = vst [vmem:[%s2 + $0xe8] sm:$0xff] %v595
  %628 = vst [vmem:[%s2 + $0xf0] sm:$0xff] %v596
  %629 = vst [vmem:[%s2 + $0xf8] sm:$0xff] %v597
  // Predicated region
  $region14: #{graph_conv_sparse.3} parent=0 // pred_check
    %p630 = pneg %p12
  $region15: #{graph_conv_sparse.3} parent=0 // pred_check_branch
    %632 = sbr.rel (%p630) target = $region17
  $region16: #{graph_conv_sparse.3} parent=0 // pred_region
    %v633 = vld [vmem:[%s2] sm:$0xff]
    %v634 = vld [vmem:[%s2 + $0x8] sm:$0xff]
    %v635 = vld [vmem:[%s2 + $0x10] sm:$0xff]
    %v636 = vld [vmem:[%s2 + $0x18] sm:$0xff]
    %v637 = vld [vmem:[%s2 + $0x20] sm:$0xff]
    %v638 = vld [vmem:[%s2 + $0x28] sm:$0xff]
    %v639 = vld [vmem:[%s2 + $0x30] sm:$0xff]
    %v640 = vld [vmem:[%s2 + $0x38] sm:$0xff]
    %v641 = vld [vmem:[%s2 + $0x40] sm:$0xff]
    %v642 = vld [vmem:[%s2 + $0x48] sm:$0xff]
    %v643 = vld [vmem:[%s2 + $0x50] sm:$0xff]
    %v644 = vld [vmem:[%s2 + $0x58] sm:$0xff]
    %v645 = vld [vmem:[%s2 + $0x60] sm:$0xff]
    %v646 = vld [vmem:[%s2 + $0x68] sm:$0xff]
    %v647 = vld [vmem:[%s2 + $0x70] sm:$0xff]
    %v648 = vld [vmem:[%s2 + $0x78] sm:$0xff]
    %v649 = vld [vmem:[%s2 + $0x80] sm:$0xff]
    %v650 = vld [vmem:[%s2 + $0x88] sm:$0xff]
    %v651 = vld [vmem:[%s2 + $0x90] sm:$0xff]
    %v652 = vld [vmem:[%s2 + $0x98] sm:$0xff]
    %v653 = vld [vmem:[%s2 + $0xa0] sm:$0xff]
    %v654 = vld [vmem:[%s2 + $0xa8] sm:$0xff]
    %v655 = vld [vmem:[%s2 + $0xb0] sm:$0xff]
    %v656 = vld [vmem:[%s2 + $0xb8] sm:$0xff]
    %v657 = vld [vmem:[%s2 + $0xc0] sm:$0xff]
    %v658 = vld [vmem:[%s2 + $0xc8] sm:$0xff]
    %v659 = vld [vmem:[%s2 + $0xd0] sm:$0xff]
    %v660 = vld [vmem:[%s2 + $0xd8] sm:$0xff]
    %v661 = vld [vmem:[%s2 + $0xe0] sm:$0xff]
    %v662 = vld [vmem:[%s2 + $0xe8] sm:$0xff]
    %v663 = vld [vmem:[%s2 + $0xf0] sm:$0xff]
    %v664 = vld [vmem:[%s2 + $0xf8] sm:$0xff]
    %vm665 = vcmp.gt.f32.partialorder %v633, 0.0
    %vm666 = vcmp.gt.f32.partialorder %v634, 0.0
    %vm667 = vcmp.gt.f32.partialorder %v635, 0.0
    %vm668 = vcmp.gt.f32.partialorder %v636, 0.0
    %vm669 = vcmp.gt.f32.partialorder %v637, 0.0
    %vm670 = vcmp.gt.f32.partialorder %v638, 0.0
    %vm671 = vcmp.gt.f32.partialorder %v639, 0.0
    %vm672 = vcmp.gt.f32.partialorder %v640, 0.0
    %vm673 = vcmp.gt.f32.partialorder %v641, 0.0
    %vm674 = vcmp.gt.f32.partialorder %v642, 0.0
    %vm675 = vcmp.gt.f32.partialorder %v643, 0.0
    %vm676 = vcmp.gt.f32.partialorder %v644, 0.0
    %vm677 = vcmp.gt.f32.partialorder %v645, 0.0
    %vm678 = vcmp.gt.f32.partialorder %v646, 0.0
    %vm679 = vcmp.gt.f32.partialorder %v647, 0.0
    %vm680 = vcmp.gt.f32.partialorder %v648, 0.0
    %vm681 = vcmp.gt.f32.partialorder %v649, 0.0
    %vm682 = vcmp.gt.f32.partialorder %v650, 0.0
    %vm683 = vcmp.gt.f32.partialorder %v651, 0.0
    %vm684 = vcmp.gt.f32.partialorder %v652, 0.0
    %vm685 = vcmp.gt.f32.partialorder %v653, 0.0
    %vm686 = vcmp.gt.f32.partialorder %v654, 0.0
    %vm687 = vcmp.gt.f32.partialorder %v655, 0.0
    %vm688 = vcmp.gt.f32.partialorder %v656, 0.0
    %vm689 = vcmp.gt.f32.partialorder %v657, 0.0
    %vm690 = vcmp.gt.f32.partialorder %v658, 0.0
    %vm691 = vcmp.gt.f32.partialorder %v659, 0.0
    %vm692 = vcmp.gt.f32.partialorder %v660, 0.0
    %vm693 = vcmp.gt.f32.partialorder %v661, 0.0
    %vm694 = vcmp.gt.f32.partialorder %v662, 0.0
    %vm695 = vcmp.gt.f32.partialorder %v663, 0.0
    %vm696 = vcmp.gt.f32.partialorder %v664, 0.0
    %v697 = vmul.f32 %v633, 0.01
    %v698 = vmul.f32 %v634, 0.01
    %v699 = vmul.f32 %v635, 0.01
    %v700 = vmul.f32 %v636, 0.01
    %v701 = vmul.f32 %v637, 0.01
    %v702 = vmul.f32 %v638, 0.01
    %v703 = vmul.f32 %v639, 0.01
    %v704 = vmul.f32 %v640, 0.01
    %v705 = vmul.f32 %v641, 0.01
    %v706 = vmul.f32 %v642, 0.01
    %v707 = vmul.f32 %v643, 0.01
    %v708 = vmul.f32 %v644, 0.01
    %v709 = vmul.f32 %v645, 0.01
    %v710 = vmul.f32 %v646, 0.01
    %v711 = vmul.f32 %v647, 0.01
    %v712 = vmul.f32 %v648, 0.01
    %v713 = vmul.f32 %v649, 0.01
    %v714 = vmul.f32 %v650, 0.01
    %v715 = vmul.f32 %v651, 0.01
    %v716 = vmul.f32 %v652, 0.01
    %v717 = vmul.f32 %v653, 0.01
    %v718 = vmul.f32 %v654, 0.01
    %v719 = vmul.f32 %v655, 0.01
    %v720 = vmul.f32 %v656, 0.01
    %v721 = vmul.f32 %v657, 0.01
    %v722 = vmul.f32 %v658, 0.01
    %v723 = vmul.f32 %v659, 0.01
    %v724 = vmul.f32 %v660, 0.01
    %v725 = vmul.f32 %v661, 0.01
    %v726 = vmul.f32 %v662, 0.01
    %v727 = vmul.f32 %v663, 0.01
    %v728 = vmul.f32 %v664, 0.01
    %v729 = vsel %vm665, %v633, %v697
    %v730 = vsel %vm666, %v634, %v698
    %v731 = vsel %vm667, %v635, %v699
    %v732 = vsel %vm668, %v636, %v700
    %v733 = vsel %vm669, %v637, %v701
    %v734 = vsel %vm670, %v638, %v702
    %v735 = vsel %vm671, %v639, %v703
    %v736 = vsel %vm672, %v640, %v704
    %v737 = vsel %vm673, %v641, %v705
    %v738 = vsel %vm674, %v642, %v706
    %v739 = vsel %vm675, %v643, %v707
    %v740 = vsel %vm676, %v644, %v708
    %v741 = vsel %vm677, %v645, %v709
    %v742 = vsel %vm678, %v646, %v710
    %v743 = vsel %vm679, %v647, %v711
    %v744 = vsel %vm680, %v648, %v712
    %v745 = vsel %vm681, %v649, %v713
    %v746 = vsel %vm682, %v650, %v714
    %v747 = vsel %vm683, %v651, %v715
    %v748 = vsel %vm684, %v652, %v716
    %v749 = vsel %vm685, %v653, %v717
    %v750 = vsel %vm686, %v654, %v718
    %v751 = vsel %vm687, %v655, %v719
    %v752 = vsel %vm688, %v656, %v720
    %v753 = vsel %vm689, %v657, %v721
    %v754 = vsel %vm690, %v658, %v722
    %v755 = vsel %vm691, %v659, %v723
    %v756 = vsel %vm692, %v660, %v724
    %v757 = vsel %vm693, %v661, %v725
    %v758 = vsel %vm694, %v662, %v726
    %v759 = vsel %vm695, %v663, %v727
    %v760 = vsel %vm696, %v664, %v728
    %761 = vst [vmem:[%s2] sm:$0xff] %v729
    %762 = vst [vmem:[%s2 + $0x8] sm:$0xff] %v730
    %763 = vst [vmem:[%s2 + $0x10] sm:$0xff] %v731
    %764 = vst [vmem:[%s2 + $0x18] sm:$0xff] %v732
    %765 = vst [vmem:[%s2 + $0x20] sm:$0xff] %v733
    %766 = vst [vmem:[%s2 + $0x28] sm:$0xff] %v734
    %767 = vst [vmem:[%s2 + $0x30] sm:$0xff] %v735
    %768 = vst [vmem:[%s2 + $0x38] sm:$0xff] %v736
    %769 = vst [vmem:[%s2 + $0x40] sm:$0xff] %v737
    %770 = vst [vmem:[%s2 + $0x48] sm:$0xff] %v738
    %771 = vst [vmem:[%s2 + $0x50] sm:$0xff] %v739
    %772 = vst [vmem:[%s2 + $0x58] sm:$0xff] %v740
    %773 = vst [vmem:[%s2 + $0x60] sm:$0xff] %v741
    %774 = vst [vmem:[%s2 + $0x68] sm:$0xff] %v742
    %775 = vst [vmem:[%s2 + $0x70] sm:$0xff] %v743
    %776 = vst [vmem:[%s2 + $0x78] sm:$0xff] %v744
    %777 = vst [vmem:[%s2 + $0x80] sm:$0xff] %v745
    %778 = vst [vmem:[%s2 + $0x88] sm:$0xff] %v746
    %779 = vst [vmem:[%s2 + $0x90] sm:$0xff] %v747
    %780 = vst [vmem:[%s2 + $0x98] sm:$0xff] %v748
    %781 = vst [vmem:[%s2 + $0xa0] sm:$0xff] %v749
    %782 = vst [vmem:[%s2 + $0xa8] sm:$0xff] %v750
    %783 = vst [vmem:[%s2 + $0xb0] sm:$0xff] %v751
    %784 = vst [vmem:[%s2 + $0xb8] sm:$0xff] %v752
    %785 = vst [vmem:[%s2 + $0xc0] sm:$0xff] %v753
    %786 = vst [vmem:[%s2 + $0xc8] sm:$0xff] %v754
    %787 = vst [vmem:[%s2 + $0xd0] sm:$0xff] %v755
    %788 = vst [vmem:[%s2 + $0xd8] sm:$0xff] %v756
    %789 = vst [vmem:[%s2 + $0xe0] sm:$0xff] %v757
    %790 = vst [vmem:[%s2 + $0xe8] sm:$0xff] %v758
    %791 = vst [vmem:[%s2 + $0xf0] sm:$0xff] %v759
    %792 = vst [vmem:[%s2 + $0xf8] sm:$0xff] %v760
  $region17: #{graph_conv_sparse.3} parent=0 // pred_fallthru
    _
  // Predicated region
  $region18: #{graph_conv_sparse.3} parent=0 // pred_check
    _
  $region19: #{graph_conv_sparse.3} parent=0 // pred_check_branch
    %794 = sbr.rel (0) target = $region21
  $region20: #{graph_conv_sparse.3} parent=0 // pred_region
    _
  $region21: #{graph_conv_sparse.3} parent=0 // pred_fallthru
    _
  // Predicated region
  $region22: #{graph_conv_sparse.3} parent=0 // pred_check
    _
  $region23: #{graph_conv_sparse.3} parent=0 // pred_check_branch
    %796 = sbr.rel (0) target = $region25
  $region24: #{graph_conv_sparse.3} parent=0 // pred_region
    _
  $region25: #{graph_conv_sparse.3} parent=0 // pred_fallthru
    _

</llo_original>
